<compile_context>
chip_gen: v6e
topology: v6e:2x2x1
jax: 0.10.0
libtpu: 0.0.40
codegen_flags: <defaults>
</compile_context>

<pallas_src>
import jax
import jax.numpy as jnp
from jax.experimental import pallas as pl
from jax.experimental.pallas import tpu as pltpu


# ----------------------------- Pallas kernel --------------------------------

def _h_sigmoid_kernel(x_ref, o_ref):
    """Elementwise hard-sigmoid on one (row_block, cols) tile."""
    x = x_ref[...]
    y = jnp.minimum(jnp.maximum(x + 3.0, 0.0), 6.0) * (1.0 / 6.0)
    o_ref[...] = y.astype(o_ref.dtype)


# ------------------------------- wrapper -------------------------------------

def h_sigmoid(x, *, target_tile_bytes=4 * 1024 * 1024, max_lane=1024):
    """h_sigmoid(x) = ReLU6(x + 3) / 6 for any shape / float dtype."""
    orig_shape = x.shape
    dtype = x.dtype
    if not jnp.issubdtype(dtype, jnp.floating):
        raise TypeError(f"h_sigmoid expects a floating dtype, got {dtype}")

    n = x.size
    if n == 0:
        return x

    itemsize = jnp.dtype(dtype).itemsize
    sublane = 8 * (4 // itemsize)      # (8,128) f32 / (16,128) bf16 / (32,128) int8

    flat = x.reshape(-1)

    # ---- choose a lane-dense column count -----------------------------------
    padded = (n % 128) != 0
    if not padded:
        # Fast path: no pad, no trailing slice; reshape is a free bitcast.
        cols = 128
        for c in (max_lane, max_lane // 2, max_lane // 4, 128):
            if c >= 128 and n % c == 0:
                cols = c
                break
        rows = n // cols
    else:
        # Rare fallback: pad up to the next multiple of 128 only (never up to
        # a multiple of the row block), slice the tail off afterwards.
        cols = 128
        rows = -(-n // cols)
        flat = jnp.pad(flat, (0, rows * cols - n))

    x2 = flat.reshape(rows, cols)

    # ---- row-block size from a byte budget -----------------------------------
    rb = target_tile_bytes // (cols * itemsize)
    rb = max(sublane, (rb // sublane) * sublane)
    if rows > 2 * sublane:
        # Keep >= 2 grid steps so v7x can shard row tiles across both TCs.
        half = ((-(-rows // 2)) + sublane - 1) // sublane * sublane
        rb = min(rb, half)
    rb = min(rb, rows)
    if rb < rows:
        # Block second-to-last dim must be a multiple of the sublane tile
        # whenever it does not span the full axis.
        rb = max(sublane, (rb // sublane) * sublane)

    grid = (pl.cdiv(rows, rb),)       # ragged last block masked by Pallas

    out = pl.pallas_call(
        _h_sigmoid_kernel,
        out_shape=jax.ShapeDtypeStruct((rows, cols), dtype),
        grid=grid,
        in_specs=[pl.BlockSpec((rb, cols), lambda i: (i, 0))],
        out_specs=pl.BlockSpec((rb, cols), lambda i: (i, 0)),
        compiler_params=pltpu.CompilerParams(
            dimension_semantics=("parallel",),
            vmem_limit_bytes=40 << 20,
        ),
    )(x2)

    if padded:
        return out.reshape(-1)[:n].reshape(orig_shape)
    return out.reshape(orig_shape)


# ------------------------------ reference ------------------------------------

def reference(x):
    """Pure-JAX mirror of the PyTorch forward: ReLU6(x + 3) / 6."""
    return jnp.clip(x + 3.0, 0.0, 6.0) / 6.0


# --------------------------------- main ---------------------------------------

if __name__ == "__main__":
    key = jax.random.PRNGKey(0)
    k0, k1 = jax.random.split(key)

    fn = jax.jit(h_sigmoid)

    # Fast path (size multiple of 128): typical NCHW activation shape.
    B, C, H, W = 2, 4, 16, 16
    x = 3.0 * jax.random.normal(k0, (B, C, H, W), jnp.float32)
    out = jax.block_until_ready(fn(x))
    ref = reference(x)
    assert out.shape == (B, C, H, W), out.shape
    assert jnp.allclose(out, ref, rtol=1e-6, atol=1e-6), float(
        jnp.max(jnp.abs(out - ref)))

    # Fallback path (size NOT a multiple of 128): exercises pad + slice.
    x_odd = 3.0 * jax.random.normal(k1, (7, 5, 3), jnp.float32)
    out_odd = jax.block_until_ready(jax.jit(h_sigmoid)(x_odd))
    ref_odd = reference(x_odd)
    assert out_odd.shape == (7, 5, 3), out_odd.shape
    assert jnp.allclose(out_odd, ref_odd, rtol=1e-6, atol=1e-6), float(
        jnp.max(jnp.abs(out_odd - ref_odd)))

    print("KERNEL_OK")
</pallas_src>

<mosaic_0001>
module attributes {stable_mosaic.version = 11 : i64} {
  func.func @_h_sigmoid_kernel(%arg0: i32, %arg1: memref<2x1024xf32, #tpu.memory_space<vmem>>, %arg2: memref<2x1024xf32, #tpu.memory_space<vmem>>) attributes {dimension_semantics = [#tpu.dimension_semantics<parallel>], iteration_bounds = array<i64: 1>, scalar_prefetch = 0 : i64, scratch_operands = 0 : i64, tpu.core_type = #tpu.core_type<tc>, window_params = [{transform_indices = @transform_0, window_bounds = array<i64: 2, 1024>}, {transform_indices = @transform_1, window_bounds = array<i64: 2, 1024>}]} {
    %c0 = arith.constant 0 : index
    %c0_0 = arith.constant 0 : index
    %0 = vector.load %arg1[%c0, %c0_0] : memref<2x1024xf32, #tpu.memory_space<vmem>>, vector<2x1024xf32>
    %cst = arith.constant 3.000000e+00 : f32
    %1 = vector.broadcast %cst : f32 to vector<2x1024xf32>
    %2 = arith.addf %0, %1 : vector<2x1024xf32>
    %cst_1 = arith.constant 0.000000e+00 : f32
    %3 = vector.broadcast %cst_1 : f32 to vector<2x1024xf32>
    %4 = arith.maximumf %2, %3 : vector<2x1024xf32>
    %cst_2 = arith.constant 6.000000e+00 : f32
    %5 = vector.broadcast %cst_2 : f32 to vector<2x1024xf32>
    %6 = arith.minimumf %4, %5 : vector<2x1024xf32>
    %cst_3 = arith.constant 0.166666672 : f32
    %7 = vector.broadcast %cst_3 : f32 to vector<2x1024xf32>
    %8 = arith.mulf %6, %7 : vector<2x1024xf32>
    %c0_4 = arith.constant 0 : index
    %c0_5 = arith.constant 0 : index
    %9 = vector.load %arg2[%c0_4, %c0_5] : memref<2x1024xf32, #tpu.memory_space<vmem>>, vector<2x1024xf32>
    tpu.vector_store %arg2[%c0_4, %c0_5], %8 {strides = array<i32>} : memref<2x1024xf32, #tpu.memory_space<vmem>>, vector<2x1024xf32>,
    return
  }
  func.func @transform_0(%arg0: i32) -> (i32, i32) {
    %c0_i32 = arith.constant 0 : i32
    %c0_i32_0 = arith.constant 0 : i32
    return %arg0, %c0_i32 : i32, i32
  }
  func.func @transform_1(%arg0: i32) -> (i32, i32) {
    %c0_i32 = arith.constant 0 : i32
    %c0_i32_0 = arith.constant 0 : i32
    return %arg0, %c0_i32 : i32, i32
  }
}

</mosaic_0001>

<llo_original>
// kernel: h_sigmoid.1
$region0: #{h_sigmoid.1}
  #allocation0 [shape = 'u32[]', space=smem, size = 0x4, offset = 0x4, fixed_abs, tag = 'smem constant byte address 0x4 - core index']
  #allocation1 [shape = 'u32[144,128]{1,0:T(1,128)}', space=vmem, size = 0x12000, scoped, tag = 'internal scratch']
  %s0 = inlined_call_operand.vmem [shape: f32[2,1024], index: 0, kind: input, shape index: {}]
  %s1 = inlined_call_operand.vmem [shape: f32[2,1024], index: 1, kind: output, shape index: {}]
  %s2 = sld [smem:[#allocation0]]
  $region14: #{h_sigmoid.1} parent=0
    _
  %s4 = ssub.s32 1, %s2
  %s5 = scalar_select 0, %s4, %s2
  // Predicated region
  $region2: #{h_sigmoid.1} parent=0 // pred_check
    _
  $region3: #{h_sigmoid.1} parent=0 // pred_check_branch
    %7 = sbr.rel (0) target = $region5
  $region4: #{h_sigmoid.1} parent=0 // pred_region
    _
  $region5: #{h_sigmoid.1} parent=0 // pred_fallthru
    _
  %v8 = vld [vmem:[%s0] sm:$0xff]
  %v9 = vld [vmem:[%s0 + $0x8] sm:$0xff]
  %v10 = vadd.f32 %v8, 3.0
  %v11 = vadd.f32 %v9, 3.0
  %v12 = vmax.f32 %v10, 0.0
  %v13 = vmax.f32 %v11, 0.0
  %v14 = vmin.f32 %v12, 6.0
  %v15 = vmin.f32 %v13, 6.0
  %v16 = vmul.f32 %v14, 0.16666667
  %v17 = vmul.f32 %v15, 0.16666667
  %18 = vst [vmem:[%s1] sm:$0xff] %v16
  %19 = vst [vmem:[%s1 + $0x8] sm:$0xff] %v17
  // Predicated region
  $region6: #{h_sigmoid.1} parent=0 // pred_check
    _
  $region7: #{h_sigmoid.1} parent=0 // pred_check_branch
    %21 = sbr.rel (0) target = $region9
  $region8: #{h_sigmoid.1} parent=0 // pred_region
    _
  $region9: #{h_sigmoid.1} parent=0 // pred_fallthru
    _
  // Predicated region
  $region10: #{h_sigmoid.1} parent=0 // pred_check
    _
  $region11: #{h_sigmoid.1} parent=0 // pred_check_branch
    %23 = sbr.rel (0) target = $region13
  $region12: #{h_sigmoid.1} parent=0 // pred_region
    _
  $region13: #{h_sigmoid.1} parent=0 // pred_fallthru
    _

</llo_original>
